<compile_context>
chip_gen: v7x
topology: tpu7x:2x2x1
jax: 0.10.0
libtpu: 0.0.40
codegen_flags: <defaults>
</compile_context>

<pallas_src>
import jax
import jax.numpy as jnp
from jax.experimental import pallas as pl
from jax.experimental.pallas import tpu as pltpu

_LANE = 128  # vreg lane width


def _round_up(x, m):
    return ((x + m - 1) // m) * m


def _choose_tile_b(B, E, itemsize):
    """Batch tile width: ~1 MiB per factor block, VMEM-guarded, >=2 grid steps."""
    b128 = _round_up(max(B, 1), _LANE)
    # ~1 MiB per factor input block -> ~4 MiB live with 2 inputs x 2 pipeline buffers.
    target = max(512, (1 << 20) // max(E * itemsize, 1))
    # VMEM guard (v7x has only 64 MiB physical): 2 inputs x 2 buffers <= ~32 MiB.
    vmem_cap = max(_LANE, (32 << 20) // max(4 * E * itemsize, 1))
    target = _round_up(min(target, vmem_cap), _LANE)
    n_steps = max(1, -(-b128 // target))
    if b128 >= 2 * _LANE:
        # >=2 grid steps so v7x megacore can shard the batch across both TCs.
        n_steps = max(n_steps, 2)
    tile_b = _round_up(-(-b128 // n_steps), _LANE)
    return tile_b, tile_b * n_steps


def _fm_kernel(u_ref, v_ref, bias_ref, out_ref):
    # u_ref, v_ref : (E, TILE_B) VMEM — batch on lanes, E on sublanes.
    # bias_ref     : (1, TILE_B) VMEM f32 (user_bias + item_bias + global_bias).
    # out_ref      : (2, TILE_B) VMEM f32 — row 0 = pred, row 1 = cvr.
    prod = u_ref[...] * v_ref[...]                                  # VPU, storage dtype
    dot = jnp.sum(prod, axis=0, keepdims=True, dtype=jnp.float32)   # (1, TILE_B), f32 accum
    pred = dot + bias_ref[...]
    out_ref[0:1, :] = pred
    out_ref[1:2, :] = jax.nn.sigmoid(pred)                          # EUP


@jax.jit
def weight_fm_forward(user_id, item_id, user_factors_t, item_factors_t,
                      user_bias, item_bias, global_bias):
    """Forward pass.  Factor tables must be pre-transposed to (E, num_rows).

    Returns (pred, cvr), each of shape (B,), float32.
    """
    B = user_id.shape[0]
    E = user_factors_t.shape[0]
    itemsize = user_factors_t.dtype.itemsize

    tile_b, b_pad = _choose_tile_b(B, E, itemsize)
    pad = b_pad - B

    # Pad with valid id 0; padded lanes are sliced off below (keep this
    # invariant if the gather is ever fused in-kernel).
    uid = jnp.pad(user_id, (0, pad))
    iid = jnp.pad(item_id, (0, pad))

    # Column gather from the pre-transposed (E, num_rows) tables: the hot-path
    # (E, b_pad) slabs are produced directly, with no relayout/transpose copy.
    u_t = jnp.take(user_factors_t, uid, axis=1)                        # (E, b_pad)
    v_t = jnp.take(item_factors_t, iid, axis=1)                        # (E, b_pad)

    # Fold all bias terms into one lane-dense stream (fuses into the gather).
    bias = (jnp.take(user_bias, uid, axis=0)
            + jnp.take(item_bias, iid, axis=0)
            + jnp.reshape(global_bias, ())).astype(jnp.float32)[None, :]  # (1, b_pad)

    grid = (b_pad // tile_b,)

    out2d = pl.pallas_call(
        _fm_kernel,
        out_shape=jax.ShapeDtypeStruct((2, b_pad), jnp.float32),
        grid=grid,
        in_specs=[
            pl.BlockSpec((E, tile_b), lambda i: (0, i)),   # u  (E, TILE_B)
            pl.BlockSpec((E, tile_b), lambda i: (0, i)),   # v  (E, TILE_B)
            pl.BlockSpec((1, tile_b), lambda i: (0, i)),   # fused biases
        ],
        out_specs=pl.BlockSpec((2, tile_b), lambda i: (0, i)),
        compiler_params=pltpu.CompilerParams(
            dimension_semantics=("parallel",),
            vmem_limit_bytes=48 * 1024 * 1024,
        ),
        cost_estimate=pl.CostEstimate(
            flops=2 * b_pad * E,
            transcendentals=b_pad,
            bytes_accessed=2 * b_pad * E * itemsize + 3 * b_pad * 4,
        ),
    )(u_t, v_t, bias)

    return out2d[0, :B], out2d[1, :B]


def _reference_forward(user_id, item_id, user_factors, item_factors,
                       user_bias, item_bias, global_bias):
    u = user_factors[user_id]
    v = item_factors[item_id]
    pred = (u * v).sum(axis=1) + user_bias[user_id] + item_bias[item_id] + global_bias
    return pred, jax.nn.sigmoid(pred)


if __name__ == "__main__":
    # Deterministic synthetic "module" parameters (shapes per weightFM.__init__).
    num_users = 64
    num_items = 64
    embedding_size = 32
    batch = 8

    key = jax.random.PRNGKey(0)
    k_uf, k_if, k_ub, k_ib, k_gb, k_uid, k_iid = jax.random.split(key, 7)

    # user_factors.weight.data.normal_(std=0.3); item_factors analogous.
    user_factors = 0.3 * jax.random.normal(k_uf, (num_users, embedding_size), jnp.float32)
    item_factors = 0.3 * jax.random.normal(k_if, (num_items, embedding_size), jnp.float32)
    user_bias = jax.random.normal(k_ub, (num_users,), jnp.float32)
    item_bias = jax.random.normal(k_ib, (num_items,), jnp.float32)
    global_bias = jax.random.normal(k_gb, (1,), jnp.float32)

    # One-time layout change, done outside the jitted hot path: store the
    # factor tables transposed as (E, num_rows) so the forward gathers columns
    # directly into the lane-dense (E, B) slab (no per-call transpose copy).
    user_factors_t = jnp.asarray(user_factors.T)
    item_factors_t = jnp.asarray(item_factors.T)

    user_id = jax.random.randint(k_uid, (batch,), 0, num_users, dtype=jnp.int32)
    item_id = jax.random.randint(k_iid, (batch,), 0, num_items, dtype=jnp.int32)

    pred, cvr = weight_fm_forward(user_id, item_id, user_factors_t, item_factors_t,
                                  user_bias, item_bias, global_bias)
    jax.block_until_ready((pred, cvr))

    ref_pred, ref_cvr = _reference_forward(user_id, item_id, user_factors, item_factors,
                                           user_bias, item_bias, global_bias)
    assert pred.shape == (batch,) and cvr.shape == (batch,)
    assert jnp.allclose(pred, ref_pred, atol=1e-5, rtol=1e-5)
    assert jnp.allclose(cvr, ref_cvr, atol=1e-5, rtol=1e-5)

    print("KERNEL_OK")
</pallas_src>

<mosaic_0001>
module attributes {stable_mosaic.version = 11 : i64} {
  func.func @_fm_kernel(%arg0: i32, %arg1: memref<32x128xf32, #tpu.memory_space<vmem>>, %arg2: memref<32x128xf32, #tpu.memory_space<vmem>>, %arg3: memref<1x128xf32, #tpu.memory_space<vmem>>, %arg4: memref<2x128xf32, #tpu.memory_space<vmem>>) attributes {dimension_semantics = [#tpu.dimension_semantics<parallel>], iteration_bounds = array<i64: 1>, scalar_prefetch = 0 : i64, scratch_operands = 0 : i64, tpu.core_type = #tpu.core_type<tc>, window_params = [{transform_indices = @transform_0, window_bounds = array<i64: 32, 128>}, {transform_indices = @transform_1, window_bounds = array<i64: 32, 128>}, {transform_indices = @transform_2, window_bounds = array<i64: 1, 128>}, {transform_indices = @transform_3, window_bounds = array<i64: 2, 128>}]} {
    %c0 = arith.constant 0 : index
    %c0_0 = arith.constant 0 : index
    %0 = vector.load %arg1[%c0, %c0_0] : memref<32x128xf32, #tpu.memory_space<vmem>>, vector<32x128xf32>
    %c0_1 = arith.constant 0 : index
    %c0_2 = arith.constant 0 : index
    %1 = vector.load %arg2[%c0_1, %c0_2] : memref<32x128xf32, #tpu.memory_space<vmem>>, vector<32x128xf32>
    %2 = arith.mulf %0, %1 : vector<32x128xf32>
    %cst = arith.constant dense<0.000000e+00> : vector<128xf32>
    %3 = vector.multi_reduction <add>, %2, %cst [0] : vector<32x128xf32> to vector<128xf32>
    %4 = vector.shape_cast %3 : vector<128xf32> to vector<1x128xf32>
    %c0_3 = arith.constant 0 : index
    %c0_4 = arith.constant 0 : index
    %5 = vector.load %arg3[%c0_3, %c0_4] : memref<1x128xf32, #tpu.memory_space<vmem>>, vector<1x128xf32>
    %6 = arith.addf %4, %5 : vector<1x128xf32>
    %c0_5 = arith.constant 0 : index
    %c0_6 = arith.constant 0 : index
    %7 = vector.load %arg4[%c0_5, %c0_6] : memref<2x128xf32, #tpu.memory_space<vmem>>, vector<1x128xf32>
    tpu.vector_store %arg4[%c0_5, %c0_6], %6 {strides = array<i32>} : memref<2x128xf32, #tpu.memory_space<vmem>>, vector<1x128xf32>,
    %8 = arith.negf %6 : vector<1x128xf32>
    %9 = math.exp %8 : vector<1x128xf32>
    %cst_7 = arith.constant 1.000000e+00 : f32
    %10 = vector.broadcast %cst_7 : f32 to vector<1x128xf32>
    %11 = arith.addf %10, %9 : vector<1x128xf32>
    %12 = arith.divf %10, %11 : vector<1x128xf32>
    %c1 = arith.constant 1 : index
    %c0_8 = arith.constant 0 : index
    %13 = vector.load %arg4[%c1, %c0_8] : memref<2x128xf32, #tpu.memory_space<vmem>>, vector<1x128xf32>
    tpu.vector_store %arg4[%c1, %c0_8], %12 {strides = array<i32>} : memref<2x128xf32, #tpu.memory_space<vmem>>, vector<1x128xf32>,
    return
  }
  func.func @transform_0(%arg0: i32) -> (i32, i32) {
    %c0_i32 = arith.constant 0 : i32
    %c0_i32_0 = arith.constant 0 : i32
    return %c0_i32, %arg0 : i32, i32
  }
  func.func @transform_1(%arg0: i32) -> (i32, i32) {
    %c0_i32 = arith.constant 0 : i32
    %c0_i32_0 = arith.constant 0 : i32
    return %c0_i32, %arg0 : i32, i32
  }
  func.func @transform_2(%arg0: i32) -> (i32, i32) {
    %c0_i32 = arith.constant 0 : i32
    %c0_i32_0 = arith.constant 0 : i32
    return %c0_i32, %arg0 : i32, i32
  }
  func.func @transform_3(%arg0: i32) -> (i32, i32) {
    %c0_i32 = arith.constant 0 : i32
    %c0_i32_0 = arith.constant 0 : i32
    return %c0_i32, %arg0 : i32, i32
  }
}

</mosaic_0001>

<llo_original>
// kernel: weight_fm_forward.1
$region0: #{weight_fm_forward.1}
  #allocation0 [shape = 'u32[]', space=smem, size = 0x4, offset = 0x4, fixed_abs, tag = 'smem constant byte address 0x4 - core index']
  #allocation1 [shape = 'u32[144,128]{1,0:T(1,128)}', space=vmem, size = 0x12000, scoped, tag = 'internal scratch']
  %s0 = inlined_call_operand.vmem [shape: f32[32,128], index: 0, kind: input, shape index: {}]
  %s1 = inlined_call_operand.vmem [shape: f32[32,128], index: 1, kind: input, shape index: {}]
  %s2 = inlined_call_operand.vmem [shape: f32[1,128], index: 2, kind: input, shape index: {}]
  %s3 = inlined_call_operand.vmem [shape: f32[2,128], index: 3, kind: output, shape index: {}]
  %s4 = sld [smem:[#allocation0]]
  $region22: #{weight_fm_forward.1} parent=0
    _
  %s6 = ssub.s32 1, %s4
  %s7 = scalar_select 0, %s6, %s4
  // Predicated region
  $region2: #{weight_fm_forward.1} parent=0 // pred_check
    _
  $region3: #{weight_fm_forward.1} parent=0 // pred_check_branch
    %9 = sbr.rel (0) target = $region5
  $region4: #{weight_fm_forward.1} parent=0 // pred_region
    _
  $region5: #{weight_fm_forward.1} parent=0 // pred_fallthru
    _
  // Predicated region
  $region6: #{weight_fm_forward.1} parent=0 // pred_check
    _
  $region7: #{weight_fm_forward.1} parent=0 // pred_check_branch
    %11 = sbr.rel (0) target = $region9
  $region8: #{weight_fm_forward.1} parent=0 // pred_region
    _
  $region9: #{weight_fm_forward.1} parent=0 // pred_fallthru
    _
  // Predicated region
  $region10: #{weight_fm_forward.1} parent=0 // pred_check
    _
  $region11: #{weight_fm_forward.1} parent=0 // pred_check_branch
    %13 = sbr.rel (0) target = $region13
  $region12: #{weight_fm_forward.1} parent=0 // pred_region
    _
  $region13: #{weight_fm_forward.1} parent=0 // pred_fallthru
    _
  %v14 = vld [vmem:[%s0] sm:$0xff]
  %v15 = vld [vmem:[%s0 + $0x8] sm:$0xff]
  %v16 = vld [vmem:[%s0 + $0x10] sm:$0xff]
  %v17 = vld [vmem:[%s0 + $0x18] sm:$0xff]
  %v18 = vld [vmem:[%s1] sm:$0xff]
  %v19 = vld [vmem:[%s1 + $0x8] sm:$0xff]
  %v20 = vld [vmem:[%s1 + $0x10] sm:$0xff]
  %v21 = vld [vmem:[%s1 + $0x18] sm:$0xff]
  %v22 = vmul.f32 %v14, %v18
  %v23 = vmul.f32 %v15, %v19
  %v24 = vmul.f32 %v16, %v20
  %v25 = vmul.f32 %v17, %v21
  %v26 = vadd.f32 %v22, %v23
  %v27 = vadd.f32 %v26, %v24
  %v28 = vadd.f32 %v27, %v25
  %v29 = vrot.slane %v28, 4
  %v30 = vadd.f32 %v28, %v29
  %v31 = vrot.slane %v30, 2
  %v32 = vadd.f32 %v30, %v31
  %v33 = vrot.slane %v32, 1
  %v34 = vadd.f32 %v32, %v33
  %v35 = vld [vmem:[%s2] sm:$0x1]
  %v36 = vadd.f32 %v34, %v35
  %37 = vst [vmem:[%s3] sm:$0x1] %v36
  %v38 = vxor.u32 %v36, 2147483648
  %v39 = vmul.f32 %v38, 1.442695
  %v40 = vpow.pop %v39
  %v41 = vadd.f32 %v40, 1.0
  %v42 = vrcp.pop %v41
  %v43 = vmul.f32 1.0, %v42
  %44 = vst [vmem:[%s3 + $0x1] sm:$0x1] %v43
  // Predicated region
  $region14: #{weight_fm_forward.1} parent=0 // pred_check
    _
  $region15: #{weight_fm_forward.1} parent=0 // pred_check_branch
    %46 = sbr.rel (0) target = $region17
  $region16: #{weight_fm_forward.1} parent=0 // pred_region
    _
  $region17: #{weight_fm_forward.1} parent=0 // pred_fallthru
    _
  // Predicated region
  $region18: #{weight_fm_forward.1} parent=0 // pred_check
    _
  $region19: #{weight_fm_forward.1} parent=0 // pred_check_branch
    %48 = sbr.rel (0) target = $region21
  $region20: #{weight_fm_forward.1} parent=0 // pred_region
    _
  $region21: #{weight_fm_forward.1} parent=0 // pred_fallthru
    _

</llo_original>
